<compile_context>
chip_gen: v7x
topology: tpu7x:2x2x1
jax: 0.10.0
libtpu: 0.0.40
codegen_flags: <defaults>
</compile_context>

<pallas_src>
import math

import jax
import jax.numpy as jnp
from jax.experimental import pallas as pl
from jax.experimental.pallas import tpu as pltpu


_KERNEL_SIZES = {
    "freqpreserve": (1, 2),
    "timepreserve": (2, 1),
    "half": (2, 2),
}

_LANE = 128
_SUBLANE = 8
# Double-buffered in/out blocks + pooling matrix budget (fits every generation's
# scoped VMEM once vmem_limit_bytes below is applied; well under v7x's 64 MiB).
_VMEM_BUDGET = 20 * 1024 * 1024
_VMEM_LIMIT = 32 * 1024 * 1024


def _round_up(a, b):
    return (a + b - 1) // b * b


def _pool_kernel(x_ref, p_ref, o_ref):
    x = x_ref[...]
    if x.dtype != jnp.float32:
        x = x.astype(jnp.float32)
    # Whole (kh, kw) average pooling as a single lane-dense matmul against a
    # block-diagonal selection/average matrix.  HIGHEST keeps f32 activations
    # exact on the MXU; the matmul width is capped by the wrapper so this stays
    # hidden under the HBM-bound DMA.
    y = jnp.dot(
        x,
        p_ref[...],
        preferred_element_type=jnp.float32,
        precision=jax.lax.Precision.HIGHEST,
    )
    o_ref[...] = y.astype(o_ref.dtype)


def downsample(x, layer_type):
    """Pallas implementation of DownSample.forward for NCHW input."""
    if layer_type == "none":
        return x
    if layer_type not in _KERNEL_SIZES:
        raise RuntimeError(
            "Got unexpected donwsampletype %s, expected is [none, timepreserve, half]"
            % layer_type
        )
    kh, kw = _KERNEL_SIZES[layer_type]
    N, C, H, W = x.shape
    Ho, Wo = H // kh, W // kw
    Hc, Wc = Ho * kh, Wo * kw
    if (Hc, Wc) != (H, W):
        # TODO(synk): F.avg_pool2d floor semantics; this crop materialises one extra
        # HBM copy on the non-divisible path only (divisible path is copy-free).
        x = x[:, :, :Hc, :Wc]

    R = N * C * Ho          # number of pooling row-groups
    Ci = kh * Wc            # input lanes per row-group
    inv = 1.0 / float(kh * kw)

    # Group-packing factor: merge G consecutive row-groups per kernel row so the
    # output lane width G*Wo approaches 128 (dense store path) while keeping the
    # block-diagonal matmul narrow enough that the MXU never becomes the critical
    # slot.  G must divide R so both reshapes below are metadata-only.
    g_cap = max(1, _LANE // max(Wo, 1))
    G = 1
    for g in range(min(g_cap, R), 0, -1):
        if R % g == 0:
            G = g
            break
    R_rows = R // G
    Lin, Lout = G * Ci, G * Wo

    xf = x.reshape(R_rows, Lin)     # free reshape (row-major merge)

    # Block-diagonal pooling matrix:
    #   P[g*Ci + dh*Wc + wo*kw + dw, g*Wo + wo] = 1/(kh*kw)
    rows = jnp.arange(Ci)
    p0 = ((rows[:, None] % Wc) // kw == jnp.arange(Wo)[None, :]).astype(jnp.float32)
    p0 = p0 * inv
    p = jnp.kron(jnp.eye(G, dtype=jnp.float32), p0) if G > 1 else p0

    # (8,128)-aware VMEM accounting: last dim padded to 128 lanes, second-to-last
    # to 8 sublanes; input/output blocks are double-buffered, pooling matrix too.
    itemsize = jnp.dtype(x.dtype).itemsize
    lin_pad = _round_up(Lin, _LANE)
    lout_pad = _round_up(Lout, _LANE)
    p_bytes = 2 * _round_up(Lin, _SUBLANE) * lout_pad * 4
    row_bytes = 2 * (lin_pad + lout_pad) * itemsize
    # TODO(synk): for very wide W (Wo >~ 800) the pooling matrix should be column-
    # tiled with a second grid axis; not needed for this module's typical shapes.
    br = max(_SUBLANE, (_VMEM_BUDGET - p_bytes) // max(row_bytes, 1))
    if R_rows >= 4 * _SUBLANE:
        # Keep >=4 grid steps so the "parallel" axis can split across 2 TCs (v7x)
        # with >=2 pipelined steps each.
        br = min(br, max(_SUBLANE, R_rows // 4))
    if br >= R_rows:
        br = R_rows
    else:
        br = max(_SUBLANE, br // _SUBLANE * _SUBLANE)

    grid = (pl.cdiv(R_rows, br),)

    cost = pl.CostEstimate(
        flops=int(2 * R_rows * Lin * Lout),
        transcendentals=0,
        bytes_accessed=int(R_rows * (Lin + Lout) * itemsize + Lin * Lout * 4),
    )

    out = pl.pallas_call(
        _pool_kernel,
        out_shape=jax.ShapeDtypeStruct((R_rows, Lout), x.dtype),
        grid=grid,
        in_specs=[
            pl.BlockSpec((br, Lin), lambda i: (i, 0)),
            pl.BlockSpec((Lin, Lout), lambda i: (0, 0)),
        ],
        out_specs=pl.BlockSpec((br, Lout), lambda i: (i, 0)),
        compiler_params=pltpu.CompilerParams(
            dimension_semantics=("parallel",),
            vmem_limit_bytes=_VMEM_LIMIT,
        ),
        cost_estimate=cost,
    )(xf, p)

    return out.reshape(N, C, Ho, Wo)   # free reshape (same flat order)


def _ref_downsample(x, layer_type):
    """Pure-JAX reference matching F.avg_pool2d (kernel == stride, floor)."""
    if layer_type == "none":
        return x
    kh, kw = _KERNEL_SIZES[layer_type]
    N, C, H, W = x.shape
    Ho, Wo = H // kh, W // kw
    xc = x[:, :, : Ho * kh, : Wo * kw]
    return xc.reshape(N, C, Ho, kh, Wo, kw).mean(axis=(3, 5))


# TODO(synk): the 3x3/1x1 convolutions, LeakyReLU and InstanceNorm of ResBlk are
# left to XLA (lax.conv / jnp ops); fusing the pooling with the producing conv
# (allow_input_fusion / one larger Pallas kernel) would remove one HBM round trip.
def _conv2d(x, w, b=None, padding=0):
    y = jax.lax.conv_general_dilated(
        x, w, window_strides=(1, 1),
        padding=[(padding, padding), (padding, padding)],
        dimension_numbers=("NCHW", "OIHW", "NCHW"))
    if b is not None:
        y = y + b.reshape(1, -1, 1, 1)
    return y


def _leaky_relu(x, slope=0.2):
    return jnp.where(x >= 0, x, slope * x)


def _instance_norm(x, gamma, beta, eps=1e-5):
    mean = x.mean(axis=(2, 3), keepdims=True)
    var = ((x - mean) ** 2).mean(axis=(2, 3), keepdims=True)
    xn = (x - mean) * jax.lax.rsqrt(var + eps)
    return xn * gamma.reshape(1, -1, 1, 1) + beta.reshape(1, -1, 1, 1)


def resblk_forward(x, params, *, layer_type="half", normalize=False, slope=0.2,
                   downsample_fn=None):
    """ResBlk.forward with sampling = DownSample(layer_type) (or None)."""
    ds = downsample if downsample_fn is None else downsample_fn

    # Shortcut branch.
    s = x
    if "conv1x1_w" in params:                      # learned_sc (dim_in != dim_out)
        s = _conv2d(s, params["conv1x1_w"], None, padding=0)
    if layer_type is not None:
        s = ds(s, layer_type)

    # Residual branch.
    r = _conv2d(x, params["conv1_w"], params["conv1_b"], padding=1)
    if layer_type is not None:
        r = ds(r, layer_type)
    if normalize:
        r = _instance_norm(r, params["norm1_g"], params["norm1_b"])
    r = _leaky_relu(r, slope)
    r = _conv2d(r, params["conv2_w"], params["conv2_b"], padding=1)
    if normalize:
        r = _instance_norm(r, params["norm2_g"], params["norm2_b"])
    r = _leaky_relu(r, slope)

    return (s + r) / math.sqrt(2.0)


if __name__ == "__main__":
    key = jax.random.PRNGKey(0)
    kx, ko, k1, kb1, k2, kb2, k3 = jax.random.split(key, 7)

    N, Cin, Cout, H, W = 2, 4, 8, 16, 16
    x = jax.random.normal(kx, (N, Cin, H, W), dtype=jnp.float32)

    ok = True

    # 1) DownSample kernel vs reference for every layer type.
    for lt in ("none", "freqpreserve", "timepreserve", "half"):
        y = jax.block_until_ready(downsample(x, lt))
        y_ref = _ref_downsample(x, lt)
        if y.shape != y_ref.shape:
            ok = False
            print(f"downsample[{lt}] shape mismatch: {y.shape} vs {y_ref.shape}")
        elif not jnp.allclose(y, y_ref, atol=1e-5, rtol=1e-5):
            ok = False
            err = jnp.max(jnp.abs(y - y_ref))
            print(f"downsample[{lt}] value mismatch, max err {err:.3e}")

    # 2) Non-divisible spatial dims (avg_pool2d floor semantics).
    x_odd = jax.random.normal(ko, (N, Cin, 15, 15), dtype=jnp.float32)
    y = jax.block_until_ready(downsample(x_odd, "half"))
    y_ref = _ref_downsample(x_odd, "half")
    if y.shape != y_ref.shape or not jnp.allclose(y, y_ref, atol=1e-5, rtol=1e-5):
        ok = False
        print("downsample floor-semantics mismatch")

    # 3) Full ResBlk forward (default config: 'half' downsample, learned shortcut).
    params = {
        "conv1_w": 0.1 * jax.random.normal(k1, (Cin, Cin, 3, 3), jnp.float32),
        "conv1_b": 0.1 * jax.random.normal(kb1, (Cin,), jnp.float32),
        "conv2_w": 0.1 * jax.random.normal(k2, (Cout, Cin, 3, 3), jnp.float32),
        "conv2_b": 0.1 * jax.random.normal(kb2, (Cout,), jnp.float32),
        "conv1x1_w": 0.1 * jax.random.normal(k3, (Cout, Cin, 1, 1), jnp.float32),
    }
    out = jax.block_until_ready(resblk_forward(x, params, layer_type="half"))
    out_ref = resblk_forward(x, params, layer_type="half",
                             downsample_fn=_ref_downsample)
    if out.shape != (N, Cout, H // 2, W // 2):
        ok = False
        print(f"resblk shape mismatch: {out.shape}")
    elif not jnp.allclose(out, out_ref, atol=1e-4, rtol=1e-4):
        ok = False
        err = jnp.max(jnp.abs(out - out_ref))
        print(f"resblk value mismatch, max err {err:.3e}")

    if ok:
        print("KERNEL_OK")
</pallas_src>

<mosaic_0001>
module attributes {stable_mosaic.version = 11 : i64} {
  func.func @_pool_kernel(%arg0: i32, %arg1: memref<8x256xf32, #tpu.memory_space<vmem>>, %arg2: memref<256x128xf32, #tpu.memory_space<vmem>>, %arg3: memref<8x128xf32, #tpu.memory_space<vmem>>) attributes {dimension_semantics = [#tpu.dimension_semantics<parallel>], iteration_bounds = array<i64: 1>, scalar_prefetch = 0 : i64, scratch_operands = 0 : i64, tpu.core_type = #tpu.core_type<tc>, window_params = [{transform_indices = @transform_0, window_bounds = array<i64: 8, 256>}, {pipeline_mode = #tpu.pipeline_mode<synchronous>, transform_indices = @transform_1, window_bounds = array<i64: 256, 128>}, {transform_indices = @transform_2, window_bounds = array<i64: 8, 128>}]} {
    %c0 = arith.constant 0 : index
    %c0_0 = arith.constant 0 : index
    %0 = vector.load %arg1[%c0, %c0_0] : memref<8x256xf32, #tpu.memory_space<vmem>>, vector<8x256xf32>
    %c0_1 = arith.constant 0 : index
    %c0_2 = arith.constant 0 : index
    %1 = vector.load %arg2[%c0_1, %c0_2] : memref<256x128xf32, #tpu.memory_space<vmem>>, vector<256x128xf32>
    %cst = arith.constant dense<0.000000e+00> : vector<8x128xf32>
    %2 = tpu.matmul %0, %1, %cst {dimension_numbers = #tpu.dot_dimension_numbers<[1], [0], [0], [1], [0, 0, 1, 1], [], []>, precision = #tpu.contract_precision<fp32>} : vector<8x256xf32>, vector<256x128xf32>, vector<8x128xf32> -> vector<8x128xf32>
    %c0_3 = arith.constant 0 : index
    %c0_4 = arith.constant 0 : index
    %3 = vector.load %arg3[%c0_3, %c0_4] : memref<8x128xf32, #tpu.memory_space<vmem>>, vector<8x128xf32>
    tpu.vector_store %arg3[%c0_3, %c0_4], %2 {strides = array<i32>} : memref<8x128xf32, #tpu.memory_space<vmem>>, vector<8x128xf32>,
    return
  }
  func.func @transform_0(%arg0: i32) -> (i32, i32) {
    %c0_i32 = arith.constant 0 : i32
    %c0_i32_0 = arith.constant 0 : i32
    return %arg0, %c0_i32 : i32, i32
  }
  func.func @transform_1(%arg0: i32) -> (i32, i32) {
    %c0_i32 = arith.constant 0 : i32
    %c0_i32_0 = arith.constant 0 : i32
    %c0_i32_1 = arith.constant 0 : i32
    return %c0_i32, %c0_i32_0 : i32, i32
  }
  func.func @transform_2(%arg0: i32) -> (i32, i32) {
    %c0_i32 = arith.constant 0 : i32
    %c0_i32_0 = arith.constant 0 : i32
    return %arg0, %c0_i32 : i32, i32
  }
}

</mosaic_0001>

<llo_original>
// kernel: tpu_custom_call.1
$region0: #{tpu_custom_call.1}
  #allocation0 [shape = 'u32[]', space=smem, size = 0x4, offset = 0x4, fixed_abs, tag = 'smem constant byte address 0x4 - core index']
  #allocation1 [shape = 'u32[144,128]{1,0:T(1,128)}', space=vmem, size = 0x12000, scoped, tag = 'internal scratch']
  %s0 = inlined_call_operand.hbm [shape: f32[8,256], index: 0, kind: input, shape index: {}]
  %s1 = inlined_call_operand.hbm [shape: f32[256,128], index: 1, kind: input, shape index: {}]
  %s2 = inlined_call_operand.hbm [shape: f32[8,128], index: 2, kind: output, shape index: {}]
  %s3 = sld [smem:[#allocation0]]
  $region26: #{tpu_custom_call.1} parent=0
    _
  %s5 = ssub.s32 1, %s3
  %s6 = scalar_select 0, %s5, %s3
  $region1: #{tpu_custom_call.1} parent=0
    #allocation2 [shape = 'u8[8192]{0}', space=vmem, size = 0x2000, scoped, tag = 'input window, operand 0, single buffered']
    #allocation3 [shape = 's32[1]{0}', space=sflag, size = 0x4, scoped, tag = 'scoped memory for tpu_custom_call.1']
    #allocation4 [shape = 's32[1]{0}', space=sflag, size = 0x4, scoped, tag = 'scoped memory for tpu_custom_call.1']
    #allocation5 [shape = 'u8[131072]{0}', space=vmem, size = 0x20000, scoped, tag = 'input window, operand 1, single buffered']
    #allocation6 [shape = 's32[1]{0}', space=sflag, size = 0x4, scoped, tag = 'scoped memory for tpu_custom_call.1']
    #allocation7 [shape = 'u8[4096]{0}', space=vmem, size = 0x1000, scoped, tag = 'output window, operand 0, single buffered']
    %7 = vsyncpa [#allocation3], 0
    %8 = vsyncpa [#allocation6], 0
    %9 = vsyncpa [#allocation4], 0
    // Predicated region
    $region2: #{tpu_custom_call.1} parent=1 // pred_check
      _
    $region3: #{tpu_custom_call.1} parent=1 // pred_check_branch
      %11 = sbr.rel (0) target = $region5
    $region4: #{tpu_custom_call.1} parent=1 // pred_region
      %s13 = ssub.s32 256, 256
      %14 = vsyncadd [#allocation3], %s13
      %s16 = sshll.u32 [#allocation2], 4
      %s17 = int_to_ptr.vmem [resolvable:$true] %s16
      %19 = dma.hbm_to_vmem [thread:$0]  %s0, 256, %s17, [#allocation3]
    $region5: #{tpu_custom_call.1} parent=1 // pred_fallthru
      _
    // Predicated region
    $region6: #{tpu_custom_call.1} parent=1 // pred_check
      _
    $region7: #{tpu_custom_call.1} parent=1 // pred_check_branch
      %21 = sbr.rel (0) target = $region9
    $region8: #{tpu_custom_call.1} parent=1 // pred_region
      %s23 = ssub.s32 4096, 4096
      %24 = vsyncadd [#allocation6], %s23
      %s25 = sshll.u32 [#allocation5], 4
      %s26 = int_to_ptr.vmem [resolvable:$true] %s25
      %31 = dma.hbm_to_vmem [thread:$0]  %s1, 4096, %s26, [#allocation6], 128, 128, 8
    $region9: #{tpu_custom_call.1} parent=1 // pred_fallthru
      _
    // Predicated region
    $region10: #{tpu_custom_call.1} parent=1 // pred_check
      _
    $region11: #{tpu_custom_call.1} parent=1 // pred_check_branch
      %33 = sbr.rel (0) target = $region13
    $region12: #{tpu_custom_call.1} parent=1 // pred_region
      %34 = dma.done [#allocation3], 256
    $region13: #{tpu_custom_call.1} parent=1 // pred_fallthru
      _
    // Predicated region
    $region14: #{tpu_custom_call.1} parent=1 // pred_check
      _
    $region15: #{tpu_custom_call.1} parent=1 // pred_check_branch
      %36 = sbr.rel (0) target = $region17
    $region16: #{tpu_custom_call.1} parent=1 // pred_region
      %37 = dma.done [#allocation6], 4096
    $region17: #{tpu_custom_call.1} parent=1 // pred_fallthru
      _
    %v38 = vld [vmem:[#allocation2] sm:$0xff]
    %v39 = vld [vmem:[#allocation2 + $0x8] sm:$0xff]
    %v40 = vld [vmem:[#allocation5] sm:$0xff]
    %v41 = vld [vmem:[#allocation5 + $0x8] sm:$0xff]
    %v42 = vld [vmem:[#allocation5 + $0x10] sm:$0xff]
    %v43 = vld [vmem:[#allocation5 + $0x18] sm:$0xff]
    %v44 = vld [vmem:[#allocation5 + $0x20] sm:$0xff]
    %v45 = vld [vmem:[#allocation5 + $0x28] sm:$0xff]
    %v46 = vld [vmem:[#allocation5 + $0x30] sm:$0xff]
    %v47 = vld [vmem:[#allocation5 + $0x38] sm:$0xff]
    %v48 = vld [vmem:[#allocation5 + $0x40] sm:$0xff]
    %v49 = vld [vmem:[#allocation5 + $0x48] sm:$0xff]
    %v50 = vld [vmem:[#allocation5 + $0x50] sm:$0xff]
    %v51 = vld [vmem:[#allocation5 + $0x58] sm:$0xff]
    %v52 = vld [vmem:[#allocation5 + $0x60] sm:$0xff]
    %v53 = vld [vmem:[#allocation5 + $0x68] sm:$0xff]
    %v54 = vld [vmem:[#allocation5 + $0x70] sm:$0xff]
    %v55 = vld [vmem:[#allocation5 + $0x78] sm:$0xff]
    %v56 = vld [vmem:[#allocation5 + $0x80] sm:$0xff]
    %v57 = vld [vmem:[#allocation5 + $0x88] sm:$0xff]
    %v58 = vld [vmem:[#allocation5 + $0x90] sm:$0xff]
    %v59 = vld [vmem:[#allocation5 + $0x98] sm:$0xff]
    %v60 = vld [vmem:[#allocation5 + $0xa0] sm:$0xff]
    %v61 = vld [vmem:[#allocation5 + $0xa8] sm:$0xff]
    %v62 = vld [vmem:[#allocation5 + $0xb0] sm:$0xff]
    %v63 = vld [vmem:[#allocation5 + $0xb8] sm:$0xff]
    %v64 = vld [vmem:[#allocation5 + $0xc0] sm:$0xff]
    %v65 = vld [vmem:[#allocation5 + $0xc8] sm:$0xff]
    %v66 = vld [vmem:[#allocation5 + $0xd0] sm:$0xff]
    %v67 = vld [vmem:[#allocation5 + $0xd8] sm:$0xff]
    %v68 = vld [vmem:[#allocation5 + $0xe0] sm:$0xff]
    %v69 = vld [vmem:[#allocation5 + $0xe8] sm:$0xff]
    %v70 = vld [vmem:[#allocation5 + $0xf0] sm:$0xff]
    %v71 = vld [vmem:[#allocation5 + $0xf8] sm:$0xff]
    %72 = vmatprep.subr.mxu0 0.0
    %v73 = vand.u32 %v40, 4294901760
    %74 = vmatpush1.msra.mxu0 %v73
    %75 = vmatprep.subr.mxu0 0.0
    %v76 = vand.u32 %v41, 4294901760
    %77 = vmatpush1.msra.mxu0 %v76
    %78 = vmatprep.subr.mxu0 0.0
    %v79 = vand.u32 %v42, 4294901760
    %80 = vmatpush1.msra.mxu0 %v79
    %81 = vmatprep.subr.mxu0 0.0
    %v82 = vand.u32 %v43, 4294901760
    %83 = vmatpush1.msra.mxu0 %v82
    %84 = vmatprep.subr.mxu0 0.0
    %v85 = vand.u32 %v44, 4294901760
    %86 = vmatpush1.msra.mxu0 %v85
    %87 = vmatprep.subr.mxu0 0.0
    %v88 = vand.u32 %v45, 4294901760
    %89 = vmatpush1.msra.mxu0 %v88
    %90 = vmatprep.subr.mxu0 0.0
    %v91 = vand.u32 %v46, 4294901760
    %92 = vmatpush1.msra.mxu0 %v91
    %93 = vmatprep.subr.mxu0 0.0
    %v94 = vand.u32 %v47, 4294901760
    %95 = vmatpush1.msra.mxu0 %v94
    %96 = vmatprep.subr.mxu0 0.0
    %v97 = vand.u32 %v48, 4294901760
    %98 = vmatpush1.msra.mxu0 %v97
    %99 = vmatprep.subr.mxu0 0.0
    %v100 = vand.u32 %v49, 4294901760
    %101 = vmatpush1.msra.mxu0 %v100
    %102 = vmatprep.subr.mxu0 0.0
    %v103 = vand.u32 %v50, 4294901760
    %104 = vmatpush1.msra.mxu0 %v103
    %105 = vmatprep.subr.mxu0 0.0
    %v106 = vand.u32 %v51, 4294901760
    %107 = vmatpush1.msra.mxu0 %v106
    %108 = vmatprep.subr.mxu0 0.0
    %v109 = vand.u32 %v52, 4294901760
    %110 = vmatpush1.msra.mxu0 %v109
    %111 = vmatprep.subr.mxu0 0.0
    %v112 = vand.u32 %v53, 4294901760
    %113 = vmatpush1.msra.mxu0 %v112
    %114 = vmatprep.subr.mxu0 0.0
    %v115 = vand.u32 %v54, 4294901760
    %116 = vmatpush1.msra.mxu0 %v115
    %117 = vmatprep.subr.mxu0 0.0
    %v118 = vand.u32 %v55, 4294901760
    %119 = vmatpush1.msra.mxu0 %v118
    %120 = vmatprep.subr.mxu0 0.0
    %v121 = vand.u32 %v56, 4294901760
    %122 = vmatpush1.msra.mxu0 %v121
    %123 = vmatprep.subr.mxu0 0.0
    %v124 = vand.u32 %v57, 4294901760
    %125 = vmatpush1.msra.mxu0 %v124
    %126 = vmatprep.subr.mxu0 0.0
    %v127 = vand.u32 %v58, 4294901760
    %128 = vmatpush1.msra.mxu0 %v127
    %129 = vmatprep.subr.mxu0 0.0
    %v130 = vand.u32 %v59, 4294901760
    %131 = vmatpush1.msra.mxu0 %v130
    %132 = vmatprep.subr.mxu0 0.0
    %v133 = vand.u32 %v60, 4294901760
    %134 = vmatpush1.msra.mxu0 %v133
    %135 = vmatprep.subr.mxu0 0.0
    %v136 = vand.u32 %v61, 4294901760
    %137 = vmatpush1.msra.mxu0 %v136
    %138 = vmatprep.subr.mxu0 0.0
    %v139 = vand.u32 %v62, 4294901760
    %140 = vmatpush1.msra.mxu0 %v139
    %141 = vmatprep.subr.mxu0 0.0
    %v142 = vand.u32 %v63, 4294901760
    %143 = vmatpush1.msra.mxu0 %v142
    %144 = vmatprep.subr.mxu0 0.0
    %v145 = vand.u32 %v64, 4294901760
    %146 = vmatpush1.msra.mxu0 %v145
    %147 = vmatprep.subr.mxu0 0.0
    %v148 = vand.u32 %v65, 4294901760
    %149 = vmatpush1.msra.mxu0 %v148
    %150 = vmatprep.subr.mxu0 0.0
    %v151 = vand.u32 %v66, 4294901760
    %152 = vmatpush1.msra.mxu0 %v151
    %153 = vmatprep.subr.mxu0 0.0
    %v154 = vand.u32 %v67, 4294901760
    %155 = vmatpush1.msra.mxu0 %v154
    %156 = vmatprep.subr.mxu0 0.0
    %v157 = vand.u32 %v68, 4294901760
    %158 = vmatpush1.msra.mxu0 %v157
    %159 = vmatprep.subr.mxu0 0.0
    %v160 = vand.u32 %v69, 4294901760
    %161 = vmatpush1.msra.mxu0 %v160
    %162 = vmatprep.subr.mxu0 0.0
    %v163 = vand.u32 %v70, 4294901760
    %164 = vmatpush1.msra.mxu0 %v163
    %165 = vmatprep.subr.mxu0 0.0
    %v166 = vand.u32 %v71, 4294901760
    %167 = vmatpush1.msra.mxu0 %v166
    %v168 = vand.u32 %v39, 4294901760
    %v169 = vsub.f32 %v39, %v168
    %v170 = vand.u32 %v169, 4294901760
    %v171 = vsub.f32 %v169, %v170
    %v172 = vand.u32 %v171, 4294901760
    %173 = vmatprep.mubr.f32.mxu0 %v172
    %v174 = vand.u32 %v38, 4294901760
    %v175 = vsub.f32 %v38, %v174
    %v176 = vand.u32 %v175, 4294901760
    %v177 = vsub.f32 %v175, %v176
    %v178 = vand.u32 %v177, 4294901760
    %179 = vmatmul.mubr.f32.gmra.mrb[0].mxu0 %v178
    %v180 = vpop.f32.mrb[0].mxu0
    %v181 = vadd.f32 0.0, %v180
    %v182 = vpop.f32.mrb[0].mxu0
    %183 = vdwg.mxu0
    %184 = vmatprep.subr.mxu0 0.0
    %v185 = vand.u32 %v40, 4294901760
    %v186 = vsub.f32 %v40, %v185
    %v187 = vand.u32 %v186, 4294901760
    %v188 = vsub.f32 %v186, %v187
    %v189 = vand.u32 %v188, 4294901760
    %190 = vmatpush1.msra.mxu0 %v189
    %191 = vmatprep.subr.mxu0 0.0
    %v192 = vand.u32 %v41, 4294901760
    %v193 = vsub.f32 %v41, %v192
    %v194 = vand.u32 %v193, 4294901760
    %v195 = vsub.f32 %v193, %v194
    %v196 = vand.u32 %v195, 4294901760
    %197 = vmatpush1.msra.mxu0 %v196
    %198 = vmatprep.subr.mxu0 0.0
    %v199 = vand.u32 %v42, 4294901760
    %v200 = vsub.f32 %v42, %v199
    %v201 = vand.u32 %v200, 4294901760
    %v202 = vsub.f32 %v200, %v201
    %v203 = vand.u32 %v202, 4294901760
    %204 = vmatpush1.msra.mxu0 %v203
    %205 = vmatprep.subr.mxu0 0.0
    %v206 = vand.u32 %v43, 4294901760
    %v207 = vsub.f32 %v43, %v206
    %v208 = vand.u32 %v207, 4294901760
    %v209 = vsub.f32 %v207, %v208
    %v210 = vand.u32 %v209, 4294901760
    %211 = vmatpush1.msra.mxu0 %v210
    %212 = vmatprep.subr.mxu0 0.0
    %v213 = vand.u32 %v44, 4294901760
    %v214 = vsub.f32 %v44, %v213
    %v215 = vand.u32 %v214, 4294901760
    %v216 = vsub.f32 %v214, %v215
    %v217 = vand.u32 %v216, 4294901760
    %218 = vmatpush1.msra.mxu0 %v217
    %219 = vmatprep.subr.mxu0 0.0
    %v220 = vand.u32 %v45, 4294901760
    %v221 = vsub.f32 %v45, %v220
    %v222 = vand.u32 %v221, 4294901760
    %v223 = vsub.f32 %v221, %v222
    %v224 = vand.u32 %v223, 4294901760
    %225 = vmatpush1.msra.mxu0 %v224
    %226 = vmatprep.subr.mxu0 0.0
    %v227 = vand.u32 %v46, 4294901760
    %v228 = vsub.f32 %v46, %v227
    %v229 = vand.u32 %v228, 4294901760
    %v230 = vsub.f32 %v228, %v229
    %v231 = vand.u32 %v230, 4294901760
    %232 = vmatpush1.msra.mxu0 %v231
    %233 = vmatprep.subr.mxu0 0.0
    %v234 = vand.u32 %v47, 4294901760
    %v235 = vsub.f32 %v47, %v234
    %v236 = vand.u32 %v235, 4294901760
    %v237 = vsub.f32 %v235, %v236
    %v238 = vand.u32 %v237, 4294901760
    %239 = vmatpush1.msra.mxu0 %v238
    %240 = vmatprep.subr.mxu0 0.0
    %v241 = vand.u32 %v48, 4294901760
    %v242 = vsub.f32 %v48, %v241
    %v243 = vand.u32 %v242, 4294901760
    %v244 = vsub.f32 %v242, %v243
    %v245 = vand.u32 %v244, 4294901760
    %246 = vmatpush1.msra.mxu0 %v245
    %247 = vmatprep.subr.mxu0 0.0
    %v248 = vand.u32 %v49, 4294901760
    %v249 = vsub.f32 %v49, %v248
    %v250 = vand.u32 %v249, 4294901760
    %v251 = vsub.f32 %v249, %v250
    %v252 = vand.u32 %v251, 4294901760
    %253 = vmatpush1.msra.mxu0 %v252
    %254 = vmatprep.subr.mxu0 0.0
    %v255 = vand.u32 %v50, 4294901760
    %v256 = vsub.f32 %v50, %v255
    %v257 = vand.u32 %v256, 4294901760
    %v258 = vsub.f32 %v256, %v257
    %v259 = vand.u32 %v258, 4294901760
    %260 = vmatpush1.msra.mxu0 %v259
    %261 = vmatprep.subr.mxu0 0.0
    %v262 = vand.u32 %v51, 4294901760
    %v263 = vsub.f32 %v51, %v262
    %v264 = vand.u32 %v263, 4294901760
    %v265 = vsub.f32 %v263, %v264
    %v266 = vand.u32 %v265, 4294901760
    %267 = vmatpush1.msra.mxu0 %v266
    %268 = vmatprep.subr.mxu0 0.0
    %v269 = vand.u32 %v52, 4294901760
    %v270 = vsub.f32 %v52, %v269
    %v271 = vand.u32 %v270, 4294901760
    %v272 = vsub.f32 %v270, %v271
    %v273 = vand.u32 %v272, 4294901760
    %274 = vmatpush1.msra.mxu0 %v273
    %275 = vmatprep.subr.mxu0 0.0
    %v276 = vand.u32 %v53, 4294901760
    %v277 = vsub.f32 %v53, %v276
    %v278 = vand.u32 %v277, 4294901760
    %v279 = vsub.f32 %v277, %v278
    %v280 = vand.u32 %v279, 4294901760
    %281 = vmatpush1.msra.mxu0 %v280
    %282 = vmatprep.subr.mxu0 0.0
    %v283 = vand.u32 %v54, 4294901760
    %v284 = vsub.f32 %v54, %v283
    %v285 = vand.u32 %v284, 4294901760
    %v286 = vsub.f32 %v284, %v285
    %v287 = vand.u32 %v286, 4294901760
    %288 = vmatpush1.msra.mxu0 %v287
    %289 = vmatprep.subr.mxu0 0.0
    %v290 = vand.u32 %v55, 4294901760
    %v291 = vsub.f32 %v55, %v290
    %v292 = vand.u32 %v291, 4294901760
    %v293 = vsub.f32 %v291, %v292
    %v294 = vand.u32 %v293, 4294901760
    %295 = vmatpush1.msra.mxu0 %v294
    %296 = vmatprep.subr.mxu0 0.0
    %v297 = vand.u32 %v56, 4294901760
    %v298 = vsub.f32 %v56, %v297
    %v299 = vand.u32 %v298, 4294901760
    %v300 = vsub.f32 %v298, %v299
    %v301 = vand.u32 %v300, 4294901760
    %302 = vmatpush1.msra.mxu0 %v301
    %303 = vmatprep.subr.mxu0 0.0
    %v304 = vand.u32 %v57, 4294901760
    %v305 = vsub.f32 %v57, %v304
    %v306 = vand.u32 %v305, 4294901760
    %v307 = vsub.f32 %v305, %v306
    %v308 = vand.u32 %v307, 4294901760
    %309 = vmatpush1.msra.mxu0 %v308
    %310 = vmatprep.subr.mxu0 0.0
    %v311 = vand.u32 %v58, 4294901760
    %v312 = vsub.f32 %v58, %v311
    %v313 = vand.u32 %v312, 4294901760
    %v314 = vsub.f32 %v312, %v313
    %v315 = vand.u32 %v314, 4294901760
    %316 = vmatpush1.msra.mxu0 %v315
    %317 = vmatprep.subr.mxu0 0.0
    %v318 = vand.u32 %v59, 4294901760
    %v319 = vsub.f32 %v59, %v318
    %v320 = vand.u32 %v319, 4294901760
    %v321 = vsub.f32 %v319, %v320
    %v322 = vand.u32 %v321, 4294901760
    %323 = vmatpush1.msra.mxu0 %v322
    %324 = vmatprep.subr.mxu0 0.0
    %v325 = vand.u32 %v60, 4294901760
    %v326 = vsub.f32 %v60, %v325
    %v327 = vand.u32 %v326, 4294901760
    %v328 = vsub.f32 %v326, %v327
    %v329 = vand.u32 %v328, 4294901760
    %330 = vmatpush1.msra.mxu0 %v329
    %331 = vmatprep.subr.mxu0 0.0
    %v332 = vand.u32 %v61, 4294901760
    %v333 = vsub.f32 %v61, %v332
    %v334 = vand.u32 %v333, 4294901760
    %v335 = vsub.f32 %v333, %v334
    %v336 = vand.u32 %v335, 4294901760
    %337 = vmatpush1.msra.mxu0 %v336
    %338 = vmatprep.subr.mxu0 0.0
    %v339 = vand.u32 %v62, 4294901760
    %v340 = vsub.f32 %v62, %v339
    %v341 = vand.u32 %v340, 4294901760
    %v342 = vsub.f32 %v340, %v341
    %v343 = vand.u32 %v342, 4294901760
    %344 = vmatpush1.msra.mxu0 %v343
    %345 = vmatprep.subr.mxu0 0.0
    %v346 = vand.u32 %v63, 4294901760
    %v347 = vsub.f32 %v63, %v346
    %v348 = vand.u32 %v347, 4294901760
    %v349 = vsub.f32 %v347, %v348
    %v350 = vand.u32 %v349, 4294901760
    %351 = vmatpush1.msra.mxu0 %v350
    %352 = vmatprep.subr.mxu0 0.0
    %v353 = vand.u32 %v64, 4294901760
    %v354 = vsub.f32 %v64, %v353
    %v355 = vand.u32 %v354, 4294901760
    %v356 = vsub.f32 %v354, %v355
    %v357 = vand.u32 %v356, 4294901760
    %358 = vmatpush1.msra.mxu0 %v357
    %359 = vmatprep.subr.mxu0 0.0
    %v360 = vand.u32 %v65, 4294901760
    %v361 = vsub.f32 %v65, %v360
    %v362 = vand.u32 %v361, 4294901760
    %v363 = vsub.f32 %v361, %v362
    %v364 = vand.u32 %v363, 4294901760
    %365 = vmatpush1.msra.mxu0 %v364
    %366 = vmatprep.subr.mxu0 0.0
    %v367 = vand.u32 %v66, 4294901760
    %v368 = vsub.f32 %v66, %v367
    %v369 = vand.u32 %v368, 4294901760
    %v370 = vsub.f32 %v368, %v369
    %v371 = vand.u32 %v370, 4294901760
    %372 = vmatpush1.msra.mxu0 %v371
    %373 = vmatprep.subr.mxu0 0.0
    %v374 = vand.u32 %v67, 4294901760
    %v375 = vsub.f32 %v67, %v374
    %v376 = vand.u32 %v375, 4294901760
    %v377 = vsub.f32 %v375, %v376
    %v378 = vand.u32 %v377, 4294901760
    %379 = vmatpush1.msra.mxu0 %v378
    %380 = vmatprep.subr.mxu0 0.0
    %v381 = vand.u32 %v68, 4294901760
    %v382 = vsub.f32 %v68, %v381
    %v383 = vand.u32 %v382, 4294901760
    %v384 = vsub.f32 %v382, %v383
    %v385 = vand.u32 %v384, 4294901760
    %386 = vmatpush1.msra.mxu0 %v385
    %387 = vmatprep.subr.mxu0 0.0
    %v388 = vand.u32 %v69, 4294901760
    %v389 = vsub.f32 %v69, %v388
    %v390 = vand.u32 %v389, 4294901760
    %v391 = vsub.f32 %v389, %v390
    %v392 = vand.u32 %v391, 4294901760
    %393 = vmatpush1.msra.mxu0 %v392
    %394 = vmatprep.subr.mxu0 0.0
    %v395 = vand.u32 %v70, 4294901760
    %v396 = vsub.f32 %v70, %v395
    %v397 = vand.u32 %v396, 4294901760
    %v398 = vsub.f32 %v396, %v397
    %v399 = vand.u32 %v398, 4294901760
    %400 = vmatpush1.msra.mxu0 %v399
    %401 = vmatprep.subr.mxu0 0.0
    %v402 = vand.u32 %v71, 4294901760
    %v403 = vsub.f32 %v71, %v402
    %v404 = vand.u32 %v403, 4294901760
    %v405 = vsub.f32 %v403, %v404
    %v406 = vand.u32 %v405, 4294901760
    %407 = vmatpush1.msra.mxu0 %v406
    %v408 = vand.u32 %v39, 4294901760
    %409 = vmatprep.mubr.f32.mxu0 %v408
    %v410 = vand.u32 %v38, 4294901760
    %411 = vmatmul.mubr.f32.gmra.mrb[0].mxu0 %v410
    %v412 = vpop.f32.mrb[0].mxu0
    %v413 = vadd.f32 %v181, %v412
    %v414 = vpop.f32.mrb[0].mxu0
    %415 = vdwg.mxu0
    %416 = vmatprep.subr.mxu0 0.0
    %v417 = vand.u32 %v40, 4294901760
    %v418 = vsub.f32 %v40, %v417
    %419 = vmatpush1.msra.mxu0 %v418
    %420 = vmatprep.subr.mxu0 0.0
    %v421 = vand.u32 %v41, 4294901760
    %v422 = vsub.f32 %v41, %v421
    %423 = vmatpush1.msra.mxu0 %v422
    %424 = vmatprep.subr.mxu0 0.0
    %v425 = vand.u32 %v42, 4294901760
    %v426 = vsub.f32 %v42, %v425
    %427 = vmatpush1.msra.mxu0 %v426
    %428 = vmatprep.subr.mxu0 0.0
    %v429 = vand.u32 %v43, 4294901760
    %v430 = vsub.f32 %v43, %v429
    %431 = vmatpush1.msra.mxu0 %v430
    %432 = vmatprep.subr.mxu0 0.0
    %v433 = vand.u32 %v44, 4294901760
    %v434 = vsub.f32 %v44, %v433
    %435 = vmatpush1.msra.mxu0 %v434
    %436 = vmatprep.subr.mxu0 0.0
    %v437 = vand.u32 %v45, 4294901760
    %v438 = vsub.f32 %v45, %v437
    %439 = vmatpush1.msra.mxu0 %v438
    %440 = vmatprep.subr.mxu0 0.0
    %v441 = vand.u32 %v46, 4294901760
    %v442 = vsub.f32 %v46, %v441
    %443 = vmatpush1.msra.mxu0 %v442
    %444 = vmatprep.subr.mxu0 0.0
    %v445 = vand.u32 %v47, 4294901760
    %v446 = vsub.f32 %v47, %v445
    %447 = vmatpush1.msra.mxu0 %v446
    %448 = vmatprep.subr.mxu0 0.0
    %v449 = vand.u32 %v48, 4294901760
    %v450 = vsub.f32 %v48, %v449
    %451 = vmatpush1.msra.mxu0 %v450
    %452 = vmatprep.subr.mxu0 0.0
    %v453 = vand.u32 %v49, 4294901760
    %v454 = vsub.f32 %v49, %v453
    %455 = vmatpush1.msra.mxu0 %v454
    %456 = vmatprep.subr.mxu0 0.0
    %v457 = vand.u32 %v50, 4294901760
    %v458 = vsub.f32 %v50, %v457
    %459 = vmatpush1.msra.mxu0 %v458
    %460 = vmatprep.subr.mxu0 0.0
    %v461 = vand.u32 %v51, 4294901760
    %v462 = vsub.f32 %v51, %v461
    %463 = vmatpush1.msra.mxu0 %v462
    %464 = vmatprep.subr.mxu0 0.0
    %v465 = vand.u32 %v52, 4294901760
    %v466 = vsub.f32 %v52, %v465
    %467 = vmatpush1.msra.mxu0 %v466
    %468 = vmatprep.subr.mxu0 0.0
    %v469 = vand.u32 %v53, 4294901760
    %v470 = vsub.f32 %v53, %v469
    %471 = vmatpush1.msra.mxu0 %v470
    %472 = vmatprep.subr.mxu0 0.0
    %v473 = vand.u32 %v54, 4294901760
    %v474 = vsub.f32 %v54, %v473
    %475 = vmatpush1.msra.mxu0 %v474
    %476 = vmatprep.subr.mxu0 0.0
    %v477 = vand.u32 %v55, 4294901760
    %v478 = vsub.f32 %v55, %v477
    %479 = vmatpush1.msra.mxu0 %v478
    %480 = vmatprep.subr.mxu0 0.0
    %v481 = vand.u32 %v56, 4294901760
    %v482 = vsub.f32 %v56, %v481
    %483 = vmatpush1.msra.mxu0 %v482
    %484 = vmatprep.subr.mxu0 0.0
    %v485 = vand.u32 %v57, 4294901760
    %v486 = vsub.f32 %v57, %v485
    %487 = vmatpush1.msra.mxu0 %v486
    %488 = vmatprep.subr.mxu0 0.0
    %v489 = vand.u32 %v58, 4294901760
    %v490 = vsub.f32 %v58, %v489
    %491 = vmatpush1.msra.mxu0 %v490
    %492 = vmatprep.subr.mxu0 0.0
    %v493 = vand.u32 %v59, 4294901760
    %v494 = vsub.f32 %v59, %v493
    %495 = vmatpush1.msra.mxu0 %v494
    %496 = vmatprep.subr.mxu0 0.0
    %v497 = vand.u32 %v60, 4294901760
    %v498 = vsub.f32 %v60, %v497
    %499 = vmatpush1.msra.mxu0 %v498
    %500 = vmatprep.subr.mxu0 0.0
    %v501 = vand.u32 %v61, 4294901760
    %v502 = vsub.f32 %v61, %v501
    %503 = vmatpush1.msra.mxu0 %v502
    %504 = vmatprep.subr.mxu0 0.0
    %v505 = vand.u32 %v62, 4294901760
    %v506 = vsub.f32 %v62, %v505
    %507 = vmatpush1.msra.mxu0 %v506
    %508 = vmatprep.subr.mxu0 0.0
    %v509 = vand.u32 %v63, 4294901760
    %v510 = vsub.f32 %v63, %v509
    %511 = vmatpush1.msra.mxu0 %v510
    %512 = vmatprep.subr.mxu0 0.0
    %v513 = vand.u32 %v64, 4294901760
    %v514 = vsub.f32 %v64, %v513
    %515 = vmatpush1.msra.mxu0 %v514
    %516 = vmatprep.subr.mxu0 0.0
    %v517 = vand.u32 %v65, 4294901760
    %v518 = vsub.f32 %v65, %v517
    %519 = vmatpush1.msra.mxu0 %v518
    %520 = vmatprep.subr.mxu0 0.0
    %v521 = vand.u32 %v66, 4294901760
    %v522 = vsub.f32 %v66, %v521
    %523 = vmatpush1.msra.mxu0 %v522
    %524 = vmatprep.subr.mxu0 0.0
    %v525 = vand.u32 %v67, 4294901760
    %v526 = vsub.f32 %v67, %v525
    %527 = vmatpush1.msra.mxu0 %v526
    %528 = vmatprep.subr.mxu0 0.0
    %v529 = vand.u32 %v68, 4294901760
    %v530 = vsub.f32 %v68, %v529
    %531 = vmatpush1.msra.mxu0 %v530
    %532 = vmatprep.subr.mxu0 0.0
    %v533 = vand.u32 %v69, 4294901760
    %v534 = vsub.f32 %v69, %v533
    %535 = vmatpush1.msra.mxu0 %v534
    %536 = vmatprep.subr.mxu0 0.0
    %v537 = vand.u32 %v70, 4294901760
    %v538 = vsub.f32 %v70, %v537
    %539 = vmatpush1.msra.mxu0 %v538
    %540 = vmatprep.subr.mxu0 0.0
    %v541 = vand.u32 %v71, 4294901760
    %v542 = vsub.f32 %v71, %v541
    %543 = vmatpush1.msra.mxu0 %v542
    %v544 = vand.u32 %v39, 4294901760
    %v545 = vsub.f32 %v39, %v544
    %546 = vmatprep.mubr.f32.mxu0 %v545
    %v547 = vand.u32 %v38, 4294901760
    %v548 = vsub.f32 %v38, %v547
    %549 = vmatmul.mubr.f32.gmra.mrb[0].mxu0 %v548
    %v550 = vpop.f32.mrb[0].mxu0
    %v551 = vadd.f32 %v413, %v550
    %v552 = vpop.f32.mrb[0].mxu0
    %553 = vdwg.mxu0
    %554 = vmatprep.subr.mxu0 0.0
    %v555 = vand.u32 %v40, 4294901760
    %556 = vmatpush1.msra.mxu0 %v555
    %557 = vmatprep.subr.mxu0 0.0
    %v558 = vand.u32 %v41, 4294901760
    %559 = vmatpush1.msra.mxu0 %v558
    %560 = vmatprep.subr.mxu0 0.0
    %v561 = vand.u32 %v42, 4294901760
    %562 = vmatpush1.msra.mxu0 %v561
    %563 = vmatprep.subr.mxu0 0.0
    %v564 = vand.u32 %v43, 4294901760
    %565 = vmatpush1.msra.mxu0 %v564
    %566 = vmatprep.subr.mxu0 0.0
    %v567 = vand.u32 %v44, 4294901760
    %568 = vmatpush1.msra.mxu0 %v567
    %569 = vmatprep.subr.mxu0 0.0
    %v570 = vand.u32 %v45, 4294901760
    %571 = vmatpush1.msra.mxu0 %v570
    %572 = vmatprep.subr.mxu0 0.0
    %v573 = vand.u32 %v46, 4294901760
    %574 = vmatpush1.msra.mxu0 %v573
    %575 = vmatprep.subr.mxu0 0.0
    %v576 = vand.u32 %v47, 4294901760
    %577 = vmatpush1.msra.mxu0 %v576
    %578 = vmatprep.subr.mxu0 0.0
    %v579 = vand.u32 %v48, 4294901760
    %580 = vmatpush1.msra.mxu0 %v579
    %581 = vmatprep.subr.mxu0 0.0
    %v582 = vand.u32 %v49, 4294901760
    %583 = vmatpush1.msra.mxu0 %v582
    %584 = vmatprep.subr.mxu0 0.0
    %v585 = vand.u32 %v50, 4294901760
    %586 = vmatpush1.msra.mxu0 %v585
    %587 = vmatprep.subr.mxu0 0.0
    %v588 = vand.u32 %v51, 4294901760
    %589 = vmatpush1.msra.mxu0 %v588
    %590 = vmatprep.subr.mxu0 0.0
    %v591 = vand.u32 %v52, 4294901760
    %592 = vmatpush1.msra.mxu0 %v591
    %593 = vmatprep.subr.mxu0 0.0
    %v594 = vand.u32 %v53, 4294901760
    %595 = vmatpush1.msra.mxu0 %v594
    %596 = vmatprep.subr.mxu0 0.0
    %v597 = vand.u32 %v54, 4294901760
    %598 = vmatpush1.msra.mxu0 %v597
    %599 = vmatprep.subr.mxu0 0.0
    %v600 = vand.u32 %v55, 4294901760
    %601 = vmatpush1.msra.mxu0 %v600
    %602 = vmatprep.subr.mxu0 0.0
    %v603 = vand.u32 %v56, 4294901760
    %604 = vmatpush1.msra.mxu0 %v603
    %605 = vmatprep.subr.mxu0 0.0
    %v606 = vand.u32 %v57, 4294901760
    %607 = vmatpush1.msra.mxu0 %v606
    %608 = vmatprep.subr.mxu0 0.0
    %v609 = vand.u32 %v58, 4294901760
    %610 = vmatpush1.msra.mxu0 %v609
    %611 = vmatprep.subr.mxu0 0.0
    %v612 = vand.u32 %v59, 4294901760
    %613 = vmatpush1.msra.mxu0 %v612
    %614 = vmatprep.subr.mxu0 0.0
    %v615 = vand.u32 %v60, 4294901760
    %616 = vmatpush1.msra.mxu0 %v615
    %617 = vmatprep.subr.mxu0 0.0
    %v618 = vand.u32 %v61, 4294901760
    %619 = vmatpush1.msra.mxu0 %v618
    %620 = vmatprep.subr.mxu0 0.0
    %v621 = vand.u32 %v62, 4294901760
    %622 = vmatpush1.msra.mxu0 %v621
    %623 = vmatprep.subr.mxu0 0.0
    %v624 = vand.u32 %v63, 4294901760
    %625 = vmatpush1.msra.mxu0 %v624
    %626 = vmatprep.subr.mxu0 0.0
    %v627 = vand.u32 %v64, 4294901760
    %628 = vmatpush1.msra.mxu0 %v627
    %629 = vmatprep.subr.mxu0 0.0
    %v630 = vand.u32 %v65, 4294901760
    %631 = vmatpush1.msra.mxu0 %v630
    %632 = vmatprep.subr.mxu0 0.0
    %v633 = vand.u32 %v66, 4294901760
    %634 = vmatpush1.msra.mxu0 %v633
    %635 = vmatprep.subr.mxu0 0.0
    %v636 = vand.u32 %v67, 4294901760
    %637 = vmatpush1.msra.mxu0 %v636
    %638 = vmatprep.subr.mxu0 0.0
    %v639 = vand.u32 %v68, 4294901760
    %640 = vmatpush1.msra.mxu0 %v639
    %641 = vmatprep.subr.mxu0 0.0
    %v642 = vand.u32 %v69, 4294901760
    %643 = vmatpush1.msra.mxu0 %v642
    %644 = vmatprep.subr.mxu0 0.0
    %v645 = vand.u32 %v70, 4294901760
    %646 = vmatpush1.msra.mxu0 %v645
    %647 = vmatprep.subr.mxu0 0.0
    %v648 = vand.u32 %v71, 4294901760
    %649 = vmatpush1.msra.mxu0 %v648
    %v650 = vand.u32 %v39, 4294901760
    %v651 = vsub.f32 %v39, %v650
    %v652 = vand.u32 %v651, 4294901760
    %653 = vmatprep.mubr.f32.mxu0 %v652
    %v654 = vand.u32 %v38, 4294901760
    %v655 = vsub.f32 %v38, %v654
    %v656 = vand.u32 %v655, 4294901760
    %657 = vmatmul.mubr.f32.gmra.mrb[0].mxu0 %v656
    %v658 = vpop.f32.mrb[0].mxu0
    %v659 = vadd.f32 %v551, %v658
    %v660 = vpop.f32.mrb[0].mxu0
    %661 = vdwg.mxu0
    %662 = vmatprep.subr.mxu0 0.0
    %v663 = vand.u32 %v40, 4294901760
    %v664 = vsub.f32 %v40, %v663
    %v665 = vand.u32 %v664, 4294901760
    %666 = vmatpush1.msra.mxu0 %v665
    %667 = vmatprep.subr.mxu0 0.0
    %v668 = vand.u32 %v41, 4294901760
    %v669 = vsub.f32 %v41, %v668
    %v670 = vand.u32 %v669, 4294901760
    %671 = vmatpush1.msra.mxu0 %v670
    %672 = vmatprep.subr.mxu0 0.0
    %v673 = vand.u32 %v42, 4294901760
    %v674 = vsub.f32 %v42, %v673
    %v675 = vand.u32 %v674, 4294901760
    %676 = vmatpush1.msra.mxu0 %v675
    %677 = vmatprep.subr.mxu0 0.0
    %v678 = vand.u32 %v43, 4294901760
    %v679 = vsub.f32 %v43, %v678
    %v680 = vand.u32 %v679, 4294901760
    %681 = vmatpush1.msra.mxu0 %v680
    %682 = vmatprep.subr.mxu0 0.0
    %v683 = vand.u32 %v44, 4294901760
    %v684 = vsub.f32 %v44, %v683
    %v685 = vand.u32 %v684, 4294901760
    %686 = vmatpush1.msra.mxu0 %v685
    %687 = vmatprep.subr.mxu0 0.0
    %v688 = vand.u32 %v45, 4294901760
    %v689 = vsub.f32 %v45, %v688
    %v690 = vand.u32 %v689, 4294901760
    %691 = vmatpush1.msra.mxu0 %v690
    %692 = vmatprep.subr.mxu0 0.0
    %v693 = vand.u32 %v46, 4294901760
    %v694 = vsub.f32 %v46, %v693
    %v695 = vand.u32 %v694, 4294901760
    %696 = vmatpush1.msra.mxu0 %v695
    %697 = vmatprep.subr.mxu0 0.0
    %v698 = vand.u32 %v47, 4294901760
    %v699 = vsub.f32 %v47, %v698
    %v700 = vand.u32 %v699, 4294901760
    %701 = vmatpush1.msra.mxu0 %v700
    %702 = vmatprep.subr.mxu0 0.0
    %v703 = vand.u32 %v48, 4294901760
    %v704 = vsub.f32 %v48, %v703
    %v705 = vand.u32 %v704, 4294901760
    %706 = vmatpush1.msra.mxu0 %v705
    %707 = vmatprep.subr.mxu0 0.0
    %v708 = vand.u32 %v49, 4294901760
    %v709 = vsub.f32 %v49, %v708
    %v710 = vand.u32 %v709, 4294901760
    %711 = vmatpush1.msra.mxu0 %v710
    %712 = vmatprep.subr.mxu0 0.0
    %v713 = vand.u32 %v50, 4294901760
    %v714 = vsub.f32 %v50, %v713
    %v715 = vand.u32 %v714, 4294901760
    %716 = vmatpush1.msra.mxu0 %v715
    %717 = vmatprep.subr.mxu0 0.0
    %v718 = vand.u32 %v51, 4294901760
    %v719 = vsub.f32 %v51, %v718
    %v720 = vand.u32 %v719, 4294901760
    %721 = vmatpush1.msra.mxu0 %v720
    %722 = vmatprep.subr.mxu0 0.0
    %v723 = vand.u32 %v52, 4294901760
    %v724 = vsub.f32 %v52, %v723
    %v725 = vand.u32 %v724, 4294901760
    %726 = vmatpush1.msra.mxu0 %v725
    %727 = vmatprep.subr.mxu0 0.0
    %v728 = vand.u32 %v53, 4294901760
    %v729 = vsub.f32 %v53, %v728
    %v730 = vand.u32 %v729, 4294901760
    %731 = vmatpush1.msra.mxu0 %v730
    %732 = vmatprep.subr.mxu0 0.0
    %v733 = vand.u32 %v54, 4294901760
    %v734 = vsub.f32 %v54, %v733
    %v735 = vand.u32 %v734, 4294901760
    %736 = vmatpush1.msra.mxu0 %v735
    %737 = vmatprep.subr.mxu0 0.0
    %v738 = vand.u32 %v55, 4294901760
    %v739 = vsub.f32 %v55, %v738
    %v740 = vand.u32 %v739, 4294901760
    %741 = vmatpush1.msra.mxu0 %v740
    %742 = vmatprep.subr.mxu0 0.0
    %v743 = vand.u32 %v56, 4294901760
    %v744 = vsub.f32 %v56, %v743
    %v745 = vand.u32 %v744, 4294901760
    %746 = vmatpush1.msra.mxu0 %v745
    %747 = vmatprep.subr.mxu0 0.0
    %v748 = vand.u32 %v57, 4294901760
    %v749 = vsub.f32 %v57, %v748
    %v750 = vand.u32 %v749, 4294901760
    %751 = vmatpush1.msra.mxu0 %v750
    %752 = vmatprep.subr.mxu0 0.0
    %v753 = vand.u32 %v58, 4294901760
    %v754 = vsub.f32 %v58, %v753
    %v755 = vand.u32 %v754, 4294901760
    %756 = vmatpush1.msra.mxu0 %v755
    %757 = vmatprep.subr.mxu0 0.0
    %v758 = vand.u32 %v59, 4294901760
    %v759 = vsub.f32 %v59, %v758
    %v760 = vand.u32 %v759, 4294901760
    %761 = vmatpush1.msra.mxu0 %v760
    %762 = vmatprep.subr.mxu0 0.0
    %v763 = vand.u32 %v60, 4294901760
    %v764 = vsub.f32 %v60, %v763
    %v765 = vand.u32 %v764, 4294901760
    %766 = vmatpush1.msra.mxu0 %v765
    %767 = vmatprep.subr.mxu0 0.0
    %v768 = vand.u32 %v61, 4294901760
    %v769 = vsub.f32 %v61, %v768
    %v770 = vand.u32 %v769, 4294901760
    %771 = vmatpush1.msra.mxu0 %v770
    %772 = vmatprep.subr.mxu0 0.0
    %v773 = vand.u32 %v62, 4294901760
    %v774 = vsub.f32 %v62, %v773
    %v775 = vand.u32 %v774, 4294901760
    %776 = vmatpush1.msra.mxu0 %v775
    %777 = vmatprep.subr.mxu0 0.0
    %v778 = vand.u32 %v63, 4294901760
    %v779 = vsub.f32 %v63, %v778
    %v780 = vand.u32 %v779, 4294901760
    %781 = vmatpush1.msra.mxu0 %v780
    %782 = vmatprep.subr.mxu0 0.0
    %v783 = vand.u32 %v64, 4294901760
    %v784 = vsub.f32 %v64, %v783
    %v785 = vand.u32 %v784, 4294901760
    %786 = vmatpush1.msra.mxu0 %v785
    %787 = vmatprep.subr.mxu0 0.0
    %v788 = vand.u32 %v65, 4294901760
    %v789 = vsub.f32 %v65, %v788
    %v790 = vand.u32 %v789, 4294901760
    %791 = vmatpush1.msra.mxu0 %v790
    %792 = vmatprep.subr.mxu0 0.0
    %v793 = vand.u32 %v66, 4294901760
    %v794 = vsub.f32 %v66, %v793
    %v795 = vand.u32 %v794, 4294901760
    %796 = vmatpush1.msra.mxu0 %v795
    %797 = vmatprep.subr.mxu0 0.0
    %v798 = vand.u32 %v67, 4294901760
    %v799 = vsub.f32 %v67, %v798
    %v800 = vand.u32 %v799, 4294901760
    %801 = vmatpush1.msra.mxu0 %v800
    %802 = vmatprep.subr.mxu0 0.0
    %v803 = vand.u32 %v68, 4294901760
    %v804 = vsub.f32 %v68, %v803
    %v805 = vand.u32 %v804, 4294901760
    %806 = vmatpush1.msra.mxu0 %v805
    %807 = vmatprep.subr.mxu0 0.0
    %v808 = vand.u32 %v69, 4294901760
    %v809 = vsub.f32 %v69, %v808
    %v810 = vand.u32 %v809, 4294901760
    %811 = vmatpush1.msra.mxu0 %v810
    %812 = vmatprep.subr.mxu0 0.0
    %v813 = vand.u32 %v70, 4294901760
    %v814 = vsub.f32 %v70, %v813
    %v815 = vand.u32 %v814, 4294901760
    %816 = vmatpush1.msra.mxu0 %v815
    %817 = vmatprep.subr.mxu0 0.0
    %v818 = vand.u32 %v71, 4294901760
    %v819 = vsub.f32 %v71, %v818
    %v820 = vand.u32 %v819, 4294901760
    %821 = vmatpush1.msra.mxu0 %v820
    %v822 = vand.u32 %v39, 4294901760
    %823 = vmatprep.mubr.f32.mxu0 %v822
    %v824 = vand.u32 %v38, 4294901760
    %825 = vmatmul.mubr.f32.gmra.mrb[0].mxu0 %v824
    %v826 = vpop.f32.mrb[0].mxu0
    %v827 = vadd.f32 %v659, %v826
    %v828 = vpop.f32.mrb[0].mxu0
    %829 = vdwg.mxu0
    %830 = vmatprep.subr.mxu0 0.0
    %v831 = vand.u32 %v40, 4294901760
    %832 = vmatpush1.msra.mxu0 %v831
    %833 = vmatprep.subr.mxu0 0.0
    %v834 = vand.u32 %v41, 4294901760
    %835 = vmatpush1.msra.mxu0 %v834
    %836 = vmatprep.subr.mxu0 0.0
    %v837 = vand.u32 %v42, 4294901760
    %838 = vmatpush1.msra.mxu0 %v837
    %839 = vmatprep.subr.mxu0 0.0
    %v840 = vand.u32 %v43, 4294901760
    %841 = vmatpush1.msra.mxu0 %v840
    %842 = vmatprep.subr.mxu0 0.0
    %v843 = vand.u32 %v44, 4294901760
    %844 = vmatpush1.msra.mxu0 %v843
    %845 = vmatprep.subr.mxu0 0.0
    %v846 = vand.u32 %v45, 4294901760
    %847 = vmatpush1.msra.mxu0 %v846
    %848 = vmatprep.subr.mxu0 0.0
    %v849 = vand.u32 %v46, 4294901760
    %850 = vmatpush1.msra.mxu0 %v849
    %851 = vmatprep.subr.mxu0 0.0
    %v852 = vand.u32 %v47, 4294901760
    %853 = vmatpush1.msra.mxu0 %v852
    %854 = vmatprep.subr.mxu0 0.0
    %v855 = vand.u32 %v48, 4294901760
    %856 = vmatpush1.msra.mxu0 %v855
    %857 = vmatprep.subr.mxu0 0.0
    %v858 = vand.u32 %v49, 4294901760
    %859 = vmatpush1.msra.mxu0 %v858
    %860 = vmatprep.subr.mxu0 0.0
    %v861 = vand.u32 %v50, 4294901760
    %862 = vmatpush1.msra.mxu0 %v861
    %863 = vmatprep.subr.mxu0 0.0
    %v864 = vand.u32 %v51, 4294901760
    %865 = vmatpush1.msra.mxu0 %v864
    %866 = vmatprep.subr.mxu0 0.0
    %v867 = vand.u32 %v52, 4294901760
    %868 = vmatpush1.msra.mxu0 %v867
    %869 = vmatprep.subr.mxu0 0.0
    %v870 = vand.u32 %v53, 4294901760
    %871 = vmatpush1.msra.mxu0 %v870
    %872 = vmatprep.subr.mxu0 0.0
    %v873 = vand.u32 %v54, 4294901760
    %874 = vmatpush1.msra.mxu0 %v873
    %875 = vmatprep.subr.mxu0 0.0
    %v876 = vand.u32 %v55, 4294901760
    %877 = vmatpush1.msra.mxu0 %v876
    %878 = vmatprep.subr.mxu0 0.0
    %v879 = vand.u32 %v56, 4294901760
    %880 = vmatpush1.msra.mxu0 %v879
    %881 = vmatprep.subr.mxu0 0.0
    %v882 = vand.u32 %v57, 4294901760
    %883 = vmatpush1.msra.mxu0 %v882
    %884 = vmatprep.subr.mxu0 0.0
    %v885 = vand.u32 %v58, 4294901760
    %886 = vmatpush1.msra.mxu0 %v885
    %887 = vmatprep.subr.mxu0 0.0
    %v888 = vand.u32 %v59, 4294901760
    %889 = vmatpush1.msra.mxu0 %v888
    %890 = vmatprep.subr.mxu0 0.0
    %v891 = vand.u32 %v60, 4294901760
    %892 = vmatpush1.msra.mxu0 %v891
    %893 = vmatprep.subr.mxu0 0.0
    %v894 = vand.u32 %v61, 4294901760
    %895 = vmatpush1.msra.mxu0 %v894
    %896 = vmatprep.subr.mxu0 0.0
    %v897 = vand.u32 %v62, 4294901760
    %898 = vmatpush1.msra.mxu0 %v897
    %899 = vmatprep.subr.mxu0 0.0
    %v900 = vand.u32 %v63, 4294901760
    %901 = vmatpush1.msra.mxu0 %v900
    %902 = vmatprep.subr.mxu0 0.0
    %v903 = vand.u32 %v64, 4294901760
    %904 = vmatpush1.msra.mxu0 %v903
    %905 = vmatprep.subr.mxu0 0.0
    %v906 = vand.u32 %v65, 4294901760
    %907 = vmatpush1.msra.mxu0 %v906
    %908 = vmatprep.subr.mxu0 0.0
    %v909 = vand.u32 %v66, 4294901760
    %910 = vmatpush1.msra.mxu0 %v909
    %911 = vmatprep.subr.mxu0 0.0
    %v912 = vand.u32 %v67, 4294901760
    %913 = vmatpush1.msra.mxu0 %v912
    %914 = vmatprep.subr.mxu0 0.0
    %v915 = vand.u32 %v68, 4294901760
    %916 = vmatpush1.msra.mxu0 %v915
    %917 = vmatprep.subr.mxu0 0.0
    %v918 = vand.u32 %v69, 4294901760
    %919 = vmatpush1.msra.mxu0 %v918
    %920 = vmatprep.subr.mxu0 0.0
    %v921 = vand.u32 %v70, 4294901760
    %922 = vmatpush1.msra.mxu0 %v921
    %923 = vmatprep.subr.mxu0 0.0
    %v924 = vand.u32 %v71, 4294901760
    %925 = vmatpush1.msra.mxu0 %v924
    %v926 = vand.u32 %v39, 4294901760
    %927 = vmatprep.mubr.f32.mxu0 %v926
    %v928 = vand.u32 %v38, 4294901760
    %929 = vmatmul.mubr.f32.gmra.mrb[0].mxu0 %v928
    %v930 = vpop.f32.mrb[0].mxu0
    %v931 = vadd.f32 %v827, %v930
    %v932 = vpop.f32.mrb[0].mxu0
    %933 = vdwg.mxu0
    %934 = vst [vmem:[#allocation7] sm:$0xff] %v931
    // Predicated region
    $region18: #{tpu_custom_call.1} parent=1 // pred_check
      _
    $region19: #{tpu_custom_call.1} parent=1 // pred_check_branch
      %936 = sbr.rel (0) target = $region21
    $region20: #{tpu_custom_call.1} parent=1 // pred_region
      %s938 = ssub.s32 128, 128
      %939 = vsyncadd [#allocation4], %s938
      %s941 = sshll.u32 [#allocation7], 4
      %s942 = int_to_ptr.vmem [resolvable:$true] %s941
      %944 = dma.vmem_to_hbm [thread:$0]  %s942, 128, %s2, [#allocation4]
    $region21: #{tpu_custom_call.1} parent=1 // pred_fallthru
      _
    // Predicated region
    $region22: #{tpu_custom_call.1} parent=1 // pred_check
      _
    $region23: #{tpu_custom_call.1} parent=1 // pred_check_branch
      %946 = sbr.rel (0) target = $region25
    $region24: #{tpu_custom_call.1} parent=1 // pred_region
      %947 = dma.done [#allocation4], 128
    $region25: #{tpu_custom_call.1} parent=1 // pred_fallthru
      _
    %948 = vsyncpa [#allocation3], 1
    %949 = vsyncpa [#allocation6], 1
    %950 = vsyncpa [#allocation4], 1

</llo_original>
